<compile_context>
chip_gen: v5e
topology: v5e:2x2
jax: 0.10.0
libtpu: 0.0.40
codegen_flags: <defaults>
</compile_context>

<pallas_src>
import functools

import jax
import jax.numpy as jnp
import numpy as np
from jax.experimental import pallas as pl
from jax.experimental.pallas import tpu as pltpu


# ---------------------------------------------------------------------------
# Kernel: one (batch*head, q-tile) step.
#   refs (mask):    q (Tq,Dk), k (Lk,Dk), v (Lk,Dv), mask (Tq,Lk) -> out (Tq,Dv), attn (Tq,Lk)
#   refs (no mask): q, k, v                                       -> out, attn
# ---------------------------------------------------------------------------
def _sdpa_kernel(*refs, scale, compute_dtype, has_mask, causal, q_tile):
    if has_mask:
        q_ref, k_ref, v_ref, mask_ref, out_ref, attn_ref = refs
    else:
        q_ref, k_ref, v_ref, out_ref, attn_ref = refs
        mask_ref = None

    # Scale q in f32 (far fewer elements than the (Tq, Lk) score block), then feed the MXU
    # in compute_dtype.  k/v arrive already in compute_dtype (cast once in the wrapper).
    q = (q_ref[...].astype(jnp.float32) * scale).astype(compute_dtype)
    k = k_ref[...]
    if k.dtype != compute_dtype:
        k = k.astype(compute_dtype)

    # scores = q @ k^T, contracting on the shared d_k axis directly (no VMEM transpose).
    s = jax.lax.dot_general(
        q, k,
        dimension_numbers=(((1,), (1,)), ((), ())),
        preferred_element_type=jnp.float32,
    )  # (Tq, Lk) f32

    if causal:
        # In-kernel causal mask: no mask DMA at all.
        row0 = pl.program_id(1) * q_tile
        rows = row0 + jax.lax.broadcasted_iota(jnp.int32, s.shape, 0)
        cols = jax.lax.broadcasted_iota(jnp.int32, s.shape, 1)
        s = jnp.where(cols <= rows, s, -1e9)
    elif mask_ref is not None:
        s = jnp.where(mask_ref[...] != 0, s, -1e9)

    # Numerically-stable softmax in f32; reciprocal on the EUP slot.
    m = jnp.max(s, axis=-1, keepdims=True)
    e = jnp.exp(s - m)
    denom = jnp.sum(e, axis=-1, keepdims=True)
    p = e * pl.reciprocal(denom, approx=True)

    v_blk = v_ref[...]
    if v_blk.dtype != compute_dtype:
        v_blk = v_blk.astype(compute_dtype)

    # Cast p once; reuse for both the attn store and the p @ v matmul when dtypes line up.
    if attn_ref.dtype == compute_dtype:
        p_c = p.astype(compute_dtype)
        attn_ref[...] = p_c
        p_mm = p_c
    else:
        attn_ref[...] = p.astype(attn_ref.dtype)
        p_mm = p.astype(compute_dtype)

    out_ref[...] = jnp.dot(
        p_mm, v_blk, preferred_element_type=jnp.float32
    ).astype(out_ref.dtype)


def _vmem_limit_bytes():
    # Re-derive the scoped VMEM limit from the chip (64 MiB on v7x, 128 MiB on v5e/v6e);
    # fall back to a conservative value if the query is unavailable.
    try:
        cap = int(pltpu.get_tpu_info().vmem_capacity_bytes)
    except Exception:
        cap = 64 * 1024 * 1024
    return min(100 * 1024 * 1024, int(cap * 0.9))


# ---------------------------------------------------------------------------
# Wrapper
# ---------------------------------------------------------------------------
def scaled_dot_product_attention(q, k, v, mask=None, *, temperature=None, causal=False,
                                 q_tile=256, compute_dtype=jnp.bfloat16,
                                 attn_dtype=None, out_dtype=None, kv_buffer_count=None):
    """q/k/v: [B, H, L, d].  mask: broadcastable to [B, H, Lq, Lk] (nonzero = keep).

    causal=True builds the mask in-kernel (mask argument must be None).
    kv_buffer_count=1 single-buffers the resident K/V blocks (VMEM-tight chips, e.g. v7x).
    """
    B, H, Lq, Dk = q.shape
    Lk = k.shape[2]
    Dv = v.shape[3]
    if temperature is None:
        temperature = float(Dk) ** 0.5
    scale = 1.0 / float(temperature)
    if out_dtype is None:
        out_dtype = q.dtype
    if attn_dtype is None:
        attn_dtype = q.dtype
    if causal and mask is not None:
        raise ValueError("pass either `mask` or `causal=True`, not both")

    BH = B * H
    # Cast MXU operands once in the wrapper (halves q/k/v DMA + VMEM for bf16).
    q3 = q.reshape(BH, Lq, Dk).astype(compute_dtype)
    k3 = k.reshape(BH, Lk, Dk).astype(compute_dtype)
    v3 = v.reshape(BH, Lk, Dv).astype(compute_dtype)

    tq = min(q_tile, Lq)
    assert Lq % tq == 0, "Lq must be divisible by the q tile size"
    n_q = Lq // tq

    kv_kwargs = {}
    if kv_buffer_count is not None:
        kv_kwargs = dict(pipeline_mode=pl.Buffered(kv_buffer_count))

    in_specs = [
        pl.BlockSpec((None, tq, Dk), lambda bh, qi: (bh, qi, 0)),
        pl.BlockSpec((None, Lk, Dk), lambda bh, qi: (bh, 0, 0), **kv_kwargs),
        pl.BlockSpec((None, Lk, Dv), lambda bh, qi: (bh, 0, 0), **kv_kwargs),
    ]
    args = [q3, k3, v3]

    has_mask = mask is not None
    if has_mask:
        mask = jnp.asarray(mask)
        if mask.ndim == 2:
            mask = mask[None, None]
        elif mask.ndim == 3:
            mask = mask[:, None]
        assert mask.ndim == 4, "mask must be broadcastable to (B, H, Lq, Lk)"
        mB, mH = mask.shape[0], mask.shape[1]
        # Broadcast only the trailing (Lq, Lk) dims; keep batch/head broadcast dims and use
        # the index_map to re-read the shared block.  int8 -> 4x less mask DMA than int32.
        m3 = jnp.broadcast_to(mask, (mB, mH, Lq, Lk)).astype(jnp.int8).reshape(mB * mH, Lq, Lk)
        if mB == 1 and mH == 1:
            mask_map = lambda bh, qi: (0, qi, 0)
        elif mB == B and mH == H:
            mask_map = lambda bh, qi: (bh, qi, 0)
        elif mB == B and mH == 1:
            mask_map = lambda bh, qi: (bh // H, qi, 0)
        elif mB == 1 and mH == H:
            mask_map = lambda bh, qi: (bh % H, qi, 0)
        else:
            raise ValueError(f"unsupported mask batch/head dims {(mB, mH)} for B={B}, H={H}")
        in_specs.append(pl.BlockSpec((None, tq, Lk), mask_map))
        args.append(m3)

    out3, attn3 = pl.pallas_call(
        functools.partial(_sdpa_kernel, scale=scale, compute_dtype=compute_dtype,
                          has_mask=has_mask, causal=causal, q_tile=tq),
        out_shape=(
            jax.ShapeDtypeStruct((BH, Lq, Dv), out_dtype),
            jax.ShapeDtypeStruct((BH, Lq, Lk), attn_dtype),
        ),
        grid=(BH, n_q),
        in_specs=in_specs,
        out_specs=(
            pl.BlockSpec((None, tq, Dv), lambda bh, qi: (bh, qi, 0)),
            pl.BlockSpec((None, tq, Lk), lambda bh, qi: (bh, qi, 0)),
        ),
        compiler_params=pltpu.CompilerParams(
            # bh "parallel" so a megacore split keeps K/V residency per core;
            # qi "arbitrary" (K/V block constant across it).
            dimension_semantics=("parallel", "arbitrary"),
            vmem_limit_bytes=_vmem_limit_bytes(),
        ),
    )(*args)

    return out3.reshape(B, H, Lq, Dv), attn3.reshape(B, H, Lq, Lk)


# ---------------------------------------------------------------------------
# Pure-JAX reference (mirrors the PyTorch forward in eval mode)
# ---------------------------------------------------------------------------
def reference_sdpa(q, k, v, mask=None, *, temperature=None):
    Dk = q.shape[-1]
    if temperature is None:
        temperature = float(Dk) ** 0.5
    attn = jnp.einsum("bhqd,bhkd->bhqk", q / temperature, k)
    if mask is not None:
        attn = jnp.where(mask == 0, -1e9, attn)
    attn = jax.nn.softmax(attn, axis=-1)
    out = jnp.einsum("bhqk,bhkd->bhqd", attn, v)
    return out, attn


# ---------------------------------------------------------------------------
if __name__ == "__main__":
    # Small but TPU-tile-friendly shapes consistent with the module (4-D q/k/v).
    B, H, L, Dk, Dv = 2, 4, 256, 64, 64
    temperature = float(Dk) ** 0.5

    key = jax.random.PRNGKey(0)
    kq, kk, kv, km = jax.random.split(key, 4)
    q = jax.random.normal(kq, (B, H, L, Dk), dtype=jnp.float32)
    k = jax.random.normal(kk, (B, H, L, Dk), dtype=jnp.float32)
    v = jax.random.normal(kv, (B, H, L, Dv), dtype=jnp.float32)

    # ---- 1) unmasked, f32 MXU path, Lq tiled (n_q = 2) ----
    out, attn = scaled_dot_product_attention(
        q, k, v, temperature=temperature, q_tile=128, compute_dtype=jnp.float32)
    out = jax.block_until_ready(out)
    attn = jax.block_until_ready(attn)
    ref_out, ref_attn = reference_sdpa(q, k, v, temperature=temperature)
    np.testing.assert_allclose(np.asarray(out), np.asarray(ref_out), rtol=2e-3, atol=2e-3)
    np.testing.assert_allclose(np.asarray(attn), np.asarray(ref_attn), rtol=2e-3, atol=2e-3)

    # ---- 2) padding-style mask, broadcast over heads and query positions: (B, 1, 1, Lk) ----
    pad_mask = (jax.random.uniform(km, (B, 1, 1, L)) > 0.3).astype(jnp.int32)
    out_m, attn_m = scaled_dot_product_attention(
        q, k, v, pad_mask, temperature=temperature, q_tile=128, compute_dtype=jnp.float32)
    out_m = jax.block_until_ready(out_m)
    ref_out_m, ref_attn_m = reference_sdpa(q, k, v, pad_mask, temperature=temperature)
    np.testing.assert_allclose(np.asarray(out_m), np.asarray(ref_out_m), rtol=2e-3, atol=2e-3)
    np.testing.assert_allclose(np.asarray(attn_m), np.asarray(ref_attn_m), rtol=2e-3, atol=2e-3)

    # ---- 3) in-kernel causal mask (zero mask DMA) ----
    out_c, attn_c = scaled_dot_product_attention(
        q, k, v, causal=True, temperature=temperature, q_tile=128, compute_dtype=jnp.float32)
    out_c = jax.block_until_ready(out_c)
    tril = jnp.tril(jnp.ones((L, L), jnp.int32))[None, None]
    ref_out_c, ref_attn_c = reference_sdpa(q, k, v, tril, temperature=temperature)
    np.testing.assert_allclose(np.asarray(out_c), np.asarray(ref_out_c), rtol=2e-3, atol=2e-3)
    np.testing.assert_allclose(np.asarray(attn_c), np.asarray(ref_attn_c), rtol=2e-3, atol=2e-3)

    # ---- 4) default bf16 MXU path + bf16 attn output (halved attn write traffic) ----
    out_bf, attn_bf = scaled_dot_product_attention(
        q, k, v, temperature=temperature, attn_dtype=jnp.bfloat16)
    out_bf = jax.block_until_ready(out_bf)
    np.testing.assert_allclose(np.asarray(out_bf), np.asarray(ref_out), rtol=3e-2, atol=3e-2)
    np.testing.assert_allclose(np.asarray(attn_bf.astype(jnp.float32)), np.asarray(ref_attn),
                               rtol=3e-2, atol=3e-2)

    assert out.shape == (B, H, L, Dv) and attn.shape == (B, H, L, L)
    print("KERNEL_OK")
</pallas_src>

<mosaic_0001>
module attributes {stable_mosaic.version = 11 : i64} {
  func.func @_sdpa_kernel(%arg0: i32, %arg1: i32, %arg2: memref<1x128x64xf32, #tpu.memory_space<vmem>>, %arg3: memref<1x256x64xf32, #tpu.memory_space<vmem>>, %arg4: memref<1x256x64xf32, #tpu.memory_space<vmem>>, %arg5: memref<1x128x64xf32, #tpu.memory_space<vmem>>, %arg6: memref<1x128x256xf32, #tpu.memory_space<vmem>>) attributes {dimension_semantics = [#tpu.dimension_semantics<parallel>, #tpu.dimension_semantics<arbitrary>], iteration_bounds = array<i64: 8, 2>, scalar_prefetch = 0 : i64, scratch_operands = 0 : i64, tpu.core_type = #tpu.core_type<tc>, window_params = [{transform_indices = @transform_0, window_bounds = array<i64: 1, 128, 64>}, {transform_indices = @transform_1, window_bounds = array<i64: 1, 256, 64>}, {transform_indices = @transform_2, window_bounds = array<i64: 1, 256, 64>}, {transform_indices = @transform_3, window_bounds = array<i64: 1, 128, 64>}, {transform_indices = @transform_4, window_bounds = array<i64: 1, 128, 256>}]} {
    %c0 = arith.constant 0 : index
    %c0_0 = arith.constant 0 : index
    %c0_1 = arith.constant 0 : index
    %0 = vector.load %arg2[%c0, %c0_0, %c0_1] : memref<1x128x64xf32, #tpu.memory_space<vmem>>, vector<1x128x64xf32>
    %1 = vector.shape_cast %0 : vector<1x128x64xf32> to vector<128x64xf32>
    %cst = arith.constant 1.250000e-01 : f32
    %2 = vector.broadcast %cst : f32 to vector<128x64xf32>
    %3 = arith.mulf %1, %2 : vector<128x64xf32>
    %c0_2 = arith.constant 0 : index
    %c0_3 = arith.constant 0 : index
    %c0_4 = arith.constant 0 : index
    %4 = vector.load %arg3[%c0_2, %c0_3, %c0_4] : memref<1x256x64xf32, #tpu.memory_space<vmem>>, vector<1x256x64xf32>
    %5 = vector.shape_cast %4 : vector<1x256x64xf32> to vector<256x64xf32>
    %cst_5 = arith.constant dense<0.000000e+00> : vector<128x256xf32>
    %6 = tpu.matmul %3, %5, %cst_5 {dimension_numbers = #tpu.dot_dimension_numbers<[1], [1], [0], [0], [0, 0, 1, 0], [], []>} : vector<128x64xf32>, vector<256x64xf32>, vector<128x256xf32> -> vector<128x256xf32>
    %cst_6 = arith.constant dense<0xFF800000> : vector<128xf32>
    %7 = vector.multi_reduction <maximumf>, %6, %cst_6 [1] : vector<128x256xf32> to vector<128xf32>
    %8 = vector.shape_cast %7 : vector<128xf32> to vector<128x1xf32>
    %9 = vector.broadcast %8 : vector<128x1xf32> to vector<128x256xf32>
    %10 = arith.subf %6, %9 : vector<128x256xf32>
    %11 = math.exp %10 : vector<128x256xf32>
    %cst_7 = arith.constant dense<0.000000e+00> : vector<128xf32>
    %12 = vector.multi_reduction <add>, %11, %cst_7 [1] : vector<128x256xf32> to vector<128xf32>
    %13 = vector.shape_cast %12 : vector<128xf32> to vector<128x1xf32>
    %14 = tpu.reciprocal %13 {approx = true} : vector<128x1xf32> -> vector<128x1xf32>
    %15 = vector.broadcast %14 : vector<128x1xf32> to vector<128x256xf32>
    %16 = arith.mulf %11, %15 : vector<128x256xf32>
    %c0_8 = arith.constant 0 : index
    %c0_9 = arith.constant 0 : index
    %c0_10 = arith.constant 0 : index
    %17 = vector.load %arg4[%c0_8, %c0_9, %c0_10] : memref<1x256x64xf32, #tpu.memory_space<vmem>>, vector<1x256x64xf32>
    %18 = vector.shape_cast %17 : vector<1x256x64xf32> to vector<256x64xf32>
    %c0_11 = arith.constant 0 : index
    %c0_12 = arith.constant 0 : index
    %c0_13 = arith.constant 0 : index
    %19 = vector.load %arg6[%c0_11, %c0_12, %c0_13] : memref<1x128x256xf32, #tpu.memory_space<vmem>>, vector<1x128x256xf32>
    %20 = vector.shape_cast %19 : vector<1x128x256xf32> to vector<128x256xf32>
    %21 = vector.shape_cast %16 : vector<128x256xf32> to vector<1x128x256xf32>
    tpu.vector_store %arg6[%c0_11, %c0_12, %c0_13], %21 {strides = array<i32>} : memref<1x128x256xf32, #tpu.memory_space<vmem>>, vector<1x128x256xf32>,
    %cst_14 = arith.constant dense<0.000000e+00> : vector<128x64xf32>
    %22 = tpu.matmul %16, %18, %cst_14 {dimension_numbers = #tpu.dot_dimension_numbers<[1], [0], [0], [1], [0, 0, 1, 1], [], []>} : vector<128x256xf32>, vector<256x64xf32>, vector<128x64xf32> -> vector<128x64xf32>
    %c0_15 = arith.constant 0 : index
    %c0_16 = arith.constant 0 : index
    %c0_17 = arith.constant 0 : index
    %23 = vector.load %arg5[%c0_15, %c0_16, %c0_17] : memref<1x128x64xf32, #tpu.memory_space<vmem>>, vector<1x128x64xf32>
    %24 = vector.shape_cast %23 : vector<1x128x64xf32> to vector<128x64xf32>
    %25 = vector.shape_cast %22 : vector<128x64xf32> to vector<1x128x64xf32>
    tpu.vector_store %arg5[%c0_15, %c0_16, %c0_17], %25 {strides = array<i32>} : memref<1x128x64xf32, #tpu.memory_space<vmem>>, vector<1x128x64xf32>,
    return
  }
  func.func @transform_0(%arg0: i32, %arg1: i32) -> (i32, i32, i32) {
    %c0_i32 = arith.constant 0 : i32
    %c0_i32_0 = arith.constant 0 : i32
    return %arg0, %arg1, %c0_i32 : i32, i32, i32
  }
  func.func @transform_1(%arg0: i32, %arg1: i32) -> (i32, i32, i32) {
    %c0_i32 = arith.constant 0 : i32
    %c0_i32_0 = arith.constant 0 : i32
    %c0_i32_1 = arith.constant 0 : i32
    return %arg0, %c0_i32, %c0_i32_0 : i32, i32, i32
  }
  func.func @transform_2(%arg0: i32, %arg1: i32) -> (i32, i32, i32) {
    %c0_i32 = arith.constant 0 : i32
    %c0_i32_0 = arith.constant 0 : i32
    %c0_i32_1 = arith.constant 0 : i32
    return %arg0, %c0_i32, %c0_i32_0 : i32, i32, i32
  }
  func.func @transform_3(%arg0: i32, %arg1: i32) -> (i32, i32, i32) {
    %c0_i32 = arith.constant 0 : i32
    %c0_i32_0 = arith.constant 0 : i32
    return %arg0, %arg1, %c0_i32 : i32, i32, i32
  }
  func.func @transform_4(%arg0: i32, %arg1: i32) -> (i32, i32, i32) {
    %c0_i32 = arith.constant 0 : i32
    %c0_i32_0 = arith.constant 0 : i32
    return %arg0, %arg1, %c0_i32 : i32, i32, i32
  }
}

</mosaic_0001>

<llo_original>
// kernel: tpu_custom_call.1
$region0: #{tpu_custom_call.1}
  #allocation0 [shape = 'u32[]', space=smem, size = 0x4, offset = 0x4, fixed_abs, tag = 'smem constant byte address 0x4 - core index']
  #allocation1 [shape = 'u32[72,128]{1,0:T(1,128)}', space=vmem, size = 0x9000, scoped, tag = 'internal scratch']
  %s0 = inlined_call_operand.vmem [shape: f32[8,256,64], index: 0, kind: input, shape index: {}]
  %s1 = inlined_call_operand.vmem [shape: f32[8,256,64], index: 1, kind: input, shape index: {}]
  %s2 = inlined_call_operand.vmem [shape: f32[8,256,64], index: 2, kind: input, shape index: {}]
  %s3 = inlined_call_operand.vmem [shape: f32[8,256,64], index: 3, kind: output, shape index: {0}]
  %s4 = inlined_call_operand.hbm [shape: f32[8,256,256], index: 4, kind: output, shape index: {1}]
  %5 = xla_tuple %s3, %s4
  %s6 = sld [smem:[#allocation0]]
  $region53: #{tpu_custom_call.1} parent=0
    _
  %s8 = ssub.s32 1, %s6
  %s9 = scalar_select 0, %s8, %s6
  $region1: #{tpu_custom_call.1} parent=0
    #allocation2 [shape = 'u8[262144]{0}', space=vmem, size = 0x40000, scoped, tag = 'output window, operand 1']
    #allocation3 [shape = 's32[2]{0}', space=sflag, size = 0x8, scoped, tag = 'scoped memory for tpu_custom_call.1']
    %10 = vsyncpa [#allocation3], 0
    %s11 = scalar_lea.sflag [#allocation3], 1
    %12 = vsyncpa %s11, 0
    loop: start=0, step=1, limit=18
    $region2: #{tpu_custom_call.1} parent=1 // loop_pre_header
      _
    $region3: #{tpu_custom_call.1} parent=1 // loop_header
      %s14 = sphi 0, %s18
      %p15 = scmp.ge.s32.totalorder %s14, 18
      %s21 = sphi 0, %s33
      %s22 = sphi 0, %s29
      %s23 = sphi 0, %s21
      %s24 = sphi 0, %s22
      %s25 = sphi 0, %s23
      %s26 = sphi 0, %s24
      %s38 = sphi 0, %s40
      %s41 = sphi 0, %s38
      %s42 = sphi 0, %s41
      %s58 = sphi 0, %s42
      %s64 = sphi 0, %s66
      %s67 = sphi 0, %s64
      %s68 = sphi 0, %s67
      %s84 = sphi 0, %s68
      %s90 = sphi 0, %s92
      %s93 = sphi 0, %s90
      %s94 = sphi 0, %s93
      %s110 = sphi 0, %s94
      %s118 = sphi 0, %s120
      %s121 = sphi 0, %s118
      %s122 = sphi 0, %s121
      %s138 = sphi 0, %s122
      %s146 = sphi 0, %s148
      %s149 = sphi 0, %s146
      %s150 = sphi 0, %s149
      %s166 = sphi 0, %s150
    $region4: #{tpu_custom_call.1} parent=1 // loop_header_branch
      %17 = sbr.rel (%p15) target = $region8
    $region5: #{tpu_custom_call.1} parent=1 // loop_body
      %s19 = ssub.s32 %s14, 1
      %s20 = ssub.s32 %s14, 2
      %s27 = sadd.s32 1, %s22
      %p28 = scmp.ge.s32.totalorder %s27, 2
      %s29 = scalar_select %p28, 0, %s27
      %s30 = sadd.s32 1, %s21
      %s31 = scalar_select %p28, %s30, %s21
      %p32 = scmp.ge.s32.totalorder %s31, 8
      %s33 = scalar_select %p32, 0, %s31
      %s34 = ssub.s32 %s21, %s33
      %s35 = ssub.s32 %s22, %s29
      %s36 = sor.u32 %s34, %s35
      %p37 = scmp.eq.s32.totalorder %s36, 0
      %s39 = sadd.s32 %s38, 1
      %s40 = scalar_select %p37, %s38, %s39
      %p43 = pneg %p37
      %p44 = scmp.eq.s32.totalorder %s14, 15
      %p45 = por %p43, %p44
      %p46 = scmp.ne.s32.totalorder %s38, %s41
      %p47 = scmp.eq.s32.totalorder %s14, 0
      %p48 = por %p46, %p47
      %p49 = scmp.ne.s32.totalorder %s38, %s41
      %p50 = scmp.eq.s32.totalorder %s19, 15
      %p51 = por %p49, %p50
      %p52 = scmp.ne.s32.totalorder %s41, %s42
      %p53 = scmp.eq.s32.totalorder %s19, 0
      %p54 = por %p52, %p53
      %p55 = scmp.ne.s32.totalorder %s41, %s42
      %p56 = scmp.eq.s32.totalorder %s20, 15
      %p57 = por %p55, %p56
      %p59 = scmp.ne.s32.totalorder %s42, %s58
      %p60 = scmp.eq.s32.totalorder %s20, 0
      %p61 = por %p59, %p60
      %s62 = ssub.s32 %s21, %s33
      %p63 = scmp.eq.s32.totalorder %s62, 0
      %s65 = sadd.s32 %s64, 1
      %s66 = scalar_select %p63, %s64, %s65
      %p69 = pneg %p63
      %p70 = scmp.eq.s32.totalorder %s14, 15
      %p71 = por %p69, %p70
      %p72 = scmp.ne.s32.totalorder %s64, %s67
      %p73 = scmp.eq.s32.totalorder %s14, 0
      %p74 = por %p72, %p73
      %p75 = scmp.ne.s32.totalorder %s64, %s67
      %p76 = scmp.eq.s32.totalorder %s19, 15
      %p77 = por %p75, %p76
      %p78 = scmp.ne.s32.totalorder %s67, %s68
      %p79 = scmp.eq.s32.totalorder %s19, 0
      %p80 = por %p78, %p79
      %p81 = scmp.ne.s32.totalorder %s67, %s68
      %p82 = scmp.eq.s32.totalorder %s20, 15
      %p83 = por %p81, %p82
      %p85 = scmp.ne.s32.totalorder %s68, %s84
      %p86 = scmp.eq.s32.totalorder %s20, 0
      %p87 = por %p85, %p86
      %s88 = ssub.s32 %s21, %s33
      %p89 = scmp.eq.s32.totalorder %s88, 0
      %s91 = sadd.s32 %s90, 1
      %s92 = scalar_select %p89, %s90, %s91
      %p95 = pneg %p89
      %p96 = scmp.eq.s32.totalorder %s14, 15
      %p97 = por %p95, %p96
      %p98 = scmp.ne.s32.totalorder %s90, %s93
      %p99 = scmp.eq.s32.totalorder %s14, 0
      %p100 = por %p98, %p99
      %p101 = scmp.ne.s32.totalorder %s90, %s93
      %p102 = scmp.eq.s32.totalorder %s19, 15
      %p103 = por %p101, %p102
      %p104 = scmp.ne.s32.totalorder %s93, %s94
      %p105 = scmp.eq.s32.totalorder %s19, 0
      %p106 = por %p104, %p105
      %p107 = scmp.ne.s32.totalorder %s93, %s94
      %p108 = scmp.eq.s32.totalorder %s20, 15
      %p109 = por %p107, %p108
      %p111 = scmp.ne.s32.totalorder %s94, %s110
      %p112 = scmp.eq.s32.totalorder %s20, 0
      %p113 = por %p111, %p112
      %s114 = ssub.s32 %s21, %s33
      %s115 = ssub.s32 %s22, %s29
      %s116 = sor.u32 %s114, %s115
      %p117 = scmp.eq.s32.totalorder %s116, 0
      %s119 = sadd.s32 %s118, 1
      %s120 = scalar_select %p117, %s118, %s119
      %p123 = pneg %p117
      %p124 = scmp.eq.s32.totalorder %s14, 15
      %p125 = por %p123, %p124
      %p126 = scmp.ne.s32.totalorder %s118, %s121
      %p127 = scmp.eq.s32.totalorder %s14, 0
      %p128 = por %p126, %p127
      %p129 = scmp.ne.s32.totalorder %s118, %s121
      %p130 = scmp.eq.s32.totalorder %s19, 15
      %p131 = por %p129, %p130
      %p132 = scmp.ne.s32.totalorder %s121, %s122
      %p133 = scmp.eq.s32.totalorder %s19, 0
      %p134 = por %p132, %p133
      %p135 = scmp.ne.s32.totalorder %s121, %s122
      %p136 = scmp.eq.s32.totalorder %s20, 15
      %p137 = por %p135, %p136
      %p139 = scmp.ne.s32.totalorder %s122, %s138
      %p140 = scmp.eq.s32.totalorder %s20, 0
      %p141 = por %p139, %p140
      %s142 = ssub.s32 %s21, %s33
      %s143 = ssub.s32 %s22, %s29
      %s144 = sor.u32 %s142, %s143
      %p145 = scmp.eq.s32.totalorder %s144, 0
      %s147 = sadd.s32 %s146, 1
      %s148 = scalar_select %p145, %s146, %s147
      %p151 = pneg %p145
      %p152 = scmp.eq.s32.totalorder %s14, 15
      %p153 = por %p151, %p152
      %p154 = scmp.ne.s32.totalorder %s146, %s149
      %p155 = scmp.eq.s32.totalorder %s14, 0
      %p156 = por %p154, %p155
      %p157 = scmp.ne.s32.totalorder %s146, %s149
      %p158 = scmp.eq.s32.totalorder %s19, 15
      %p159 = por %p157, %p158
      %p160 = scmp.ne.s32.totalorder %s149, %s150
      %p161 = scmp.eq.s32.totalorder %s19, 0
      %p162 = por %p160, %p161
      %p163 = scmp.ne.s32.totalorder %s149, %s150
      %p164 = scmp.eq.s32.totalorder %s20, 15
      %p165 = por %p163, %p164
      %p167 = scmp.ne.s32.totalorder %s150, %s166
      %p168 = scmp.eq.s32.totalorder %s20, 0
      %p169 = por %p167, %p168
      %p170 = scmp.le.s32.totalorder 1, %s14
      %p171 = scmp.lt.s32.totalorder %s14, 17
      %p172 = pnand %p170, %p171
      %p173 = pneg %p172
      // Predicated region
      $region9: #{tpu_custom_call.1} parent=5 // pred_check
        _
      $region10: #{tpu_custom_call.1} parent=5 // pred_check_branch
        %175 = sbr.rel (%p172) target = $region12
      $region11: #{tpu_custom_call.1} parent=5 // pred_region
        %s176 = ssub.s32 %s14, 1
      $region12: #{tpu_custom_call.1} parent=5 // pred_fallthru
        _
      %p177 = scmp.lt.s32.totalorder %s14, 16
      // Predicated region
      $region13: #{tpu_custom_call.1} parent=5 // pred_check
        %p178 = pneg %p177
      $region14: #{tpu_custom_call.1} parent=5 // pred_check_branch
        %180 = sbr.rel (%p178) target = $region16
      $region15: #{tpu_custom_call.1} parent=5 // pred_region
        // Predicated region
        $region17: #{tpu_custom_call.1} parent=15 // pred_check
          %p181 = pneg %p48
        $region18: #{tpu_custom_call.1} parent=15 // pred_check_branch
          %183 = sbr.rel (%p181) target = $region20
        $region19: #{tpu_custom_call.1} parent=15 // pred_region
          %s184 = smul.u32 16, %s22
          %p185 = scmp.lt.s32.totalorder %s21, 7
          %s186 = scalar_select %p185, %s21, 7
          %p187 = scmp.lt.s32.totalorder %s184, 31
          %s188 = scalar_select %p187, %s184, 31
          %s189 = smul.addr %s186, 32
          %s190 = sadd.s32 %s188, %s189
          %s191 = smul.addr %s190, 8
          %s192 = scalar_lea.vmem %s0, %s191
          %s193 = smul.u32 16, %s22
        $region20: #{tpu_custom_call.1} parent=15 // pred_fallthru
          _
        // Predicated region
        $region21: #{tpu_custom_call.1} parent=15 // pred_check
          %p194 = pneg %p74
        $region22: #{tpu_custom_call.1} parent=15 // pred_check_branch
          %196 = sbr.rel (%p194) target = $region24
        $region23: #{tpu_custom_call.1} parent=15 // pred_region
          %p197 = scmp.lt.s32.totalorder %s21, 7
          %s198 = scalar_select %p197, %s21, 7
          %s199 = smul.addr %s198, 32
          %s200 = smul.addr %s199, 8
          %s201 = scalar_lea.vmem %s1, %s200
        $region24: #{tpu_custom_call.1} parent=15 // pred_fallthru
          _
        // Predicated region
        $region25: #{tpu_custom_call.1} parent=15 // pred_check
          %p202 = pneg %p100
        $region26: #{tpu_custom_call.1} parent=15 // pred_check_branch
          %204 = sbr.rel (%p202) target = $region28
        $region27: #{tpu_custom_call.1} parent=15 // pred_region
          %p205 = scmp.lt.s32.totalorder %s21, 7
          %s206 = scalar_select %p205, %s21, 7
          %s207 = smul.addr %s206, 32
          %s208 = smul.addr %s207, 8
          %s209 = scalar_lea.vmem %s2, %s208
        $region28: #{tpu_custom_call.1} parent=15 // pred_fallthru
          _
      $region16: #{tpu_custom_call.1} parent=5 // pred_fallthru
        _
      %p210 = scmp.le.s32.totalorder 1, %s14
      %p211 = scmp.lt.s32.totalorder %s14, 17
      %p212 = pnand %p210, %p211
      %p213 = pneg %p212
      // Predicated region
      $region29: #{tpu_custom_call.1} parent=5 // pred_check
        _
      $region30: #{tpu_custom_call.1} parent=5 // pred_check_branch
        %215 = sbr.rel (%p212) target = $region32
      $region31: #{tpu_custom_call.1} parent=5 // pred_region
        %s216 = ssub.s32 %s14, 1
        %s217 = smul.u32 16, %s24
        %p218 = scmp.lt.s32.totalorder %s23, 7
        %s219 = scalar_select %p218, %s23, 7
        %p220 = scmp.lt.s32.totalorder %s217, 31
        %s221 = scalar_select %p220, %s217, 31
        %s222 = smul.addr %s219, 32
        %s223 = sadd.s32 %s221, %s222
        %s224 = smul.addr %s223, 8
        %s225 = scalar_lea.vmem %s0, %s224
        %p226 = pneg %p54
        %p227 = pneg %p51
        %p228 = scmp.lt.s32.totalorder %s23, 7
        %s229 = scalar_select %p228, %s23, 7
        %s230 = smul.addr %s229, 32
        %s231 = smul.addr %s230, 8
        %s232 = scalar_lea.vmem %s1, %s231
        %p233 = pneg %p80
        %p234 = pneg %p77
        %p235 = scmp.lt.s32.totalorder %s23, 7
        %s236 = scalar_select %p235, %s23, 7
        %s237 = smul.addr %s236, 32
        %s238 = smul.addr %s237, 8
        %s239 = scalar_lea.vmem %s2, %s238
        %p240 = pneg %p106
        %p241 = pneg %p103
        %p242 = pneg %p134
        %p243 = pneg %p131
        %s244 = smul.u32 16, %s24
        %p245 = scmp.lt.s32.totalorder %s23, 7
        %s246 = scalar_select %p245, %s23, 7
        %p247 = scmp.lt.s32.totalorder %s244, 31
        %s248 = scalar_select %p247, %s244, 31
        %s249 = smul.addr %s246, 32
        %s250 = sadd.s32 %s248, %s249
        %s251 = smul.addr %s250, 8
        %s252 = scalar_lea.vmem %s3, %s251
        %p253 = pneg %p162
        %p254 = pneg %p159
        %s255 = sand.u32 %s149, 1
        %s256 = scalar_lea.sflag [#allocation3], %s255
        %s257 = sand.u32 %s149, 1
        %s258 = smul.addr %s257, 256
        %s259 = scalar_lea.vmem [#allocation2], %s258
        %s260 = smul.u32 16, %s24
        %p261 = scmp.lt.s32.totalorder %s23, 7
        %s262 = scalar_select %p261, %s23, 7
        %p263 = scmp.lt.s32.totalorder %s260, 31
        %s264 = scalar_select %p263, %s260, 31
        %s265 = smul.addr %s262, 32
        %s266 = sadd.s32 %s264, %s265
        %s267 = smul.addr %s266, 8
        %s268 = scalar_lea.vmem %s0, %s267
        %s269 = smul.u32 16, %s24
        %p270 = scmp.lt.s32.totalorder %s23, 7
        %s271 = scalar_select %p270, %s23, 7
        %s272 = smul.addr %s271, 32
        %s273 = smul.addr %s272, 8
        %s274 = scalar_lea.vmem %s1, %s273
        %p275 = scmp.lt.s32.totalorder %s23, 7
        %s276 = scalar_select %p275, %s23, 7
        %s277 = smul.addr %s276, 32
        %s278 = smul.addr %s277, 8
        %s279 = scalar_lea.vmem %s2, %s278
        %s280 = smul.u32 16, %s24
        %p281 = scmp.lt.s32.totalorder %s23, 7
        %s282 = scalar_select %p281, %s23, 7
        %p283 = scmp.lt.s32.totalorder %s280, 31
        %s284 = scalar_select %p283, %s280, 31
        %s285 = smul.addr %s282, 32
        %s286 = sadd.s32 %s284, %s285
        %s287 = smul.addr %s286, 8
        %s288 = scalar_lea.vmem %s3, %s287
        %s289 = smul.u32 16, %s24
        %s290 = smul.u32 16, %s24
        %v291 = vld [vmem:[%s268] sm:$0xff]
        %v292 = vld [vmem:[%s268 + $0x8] sm:$0xff]
        %v293 = vld [vmem:[%s268 + $0x10] sm:$0xff]
        %v294 = vld [vmem:[%s268 + $0x18] sm:$0xff]
        %v295 = vld [vmem:[%s268 + $0x20] sm:$0xff]
        %v296 = vld [vmem:[%s268 + $0x28] sm:$0xff]
        %v297 = vld [vmem:[%s268 + $0x30] sm:$0xff]
        %v298 = vld [vmem:[%s268 + $0x38] sm:$0xff]
        %v299 = vld [vmem:[%s268 + $0x40] sm:$0xff]
        %v300 = vld [vmem:[%s268 + $0x48] sm:$0xff]
        %v301 = vld [vmem:[%s268 + $0x50] sm:$0xff]
        %v302 = vld [vmem:[%s268 + $0x58] sm:$0xff]
        %v303 = vld [vmem:[%s268 + $0x60] sm:$0xff]
        %v304 = vld [vmem:[%s268 + $0x68] sm:$0xff]
        %v305 = vld [vmem:[%s268 + $0x70] sm:$0xff]
        %v306 = vld [vmem:[%s268 + $0x78] sm:$0xff]
        %v307 = vmul.f32 %v291, 0.125
        %v308 = vmul.f32 %v292, 0.125
        %v309 = vmul.f32 %v293, 0.125
        %v310 = vmul.f32 %v294, 0.125
        %v311 = vmul.f32 %v295, 0.125
        %v312 = vmul.f32 %v296, 0.125
        %v313 = vmul.f32 %v297, 0.125
        %v314 = vmul.f32 %v298, 0.125
        %v315 = vmul.f32 %v299, 0.125
        %v316 = vmul.f32 %v300, 0.125
        %v317 = vmul.f32 %v301, 0.125
        %v318 = vmul.f32 %v302, 0.125
        %v319 = vmul.f32 %v303, 0.125
        %v320 = vmul.f32 %v304, 0.125
        %v321 = vmul.f32 %v305, 0.125
        %v322 = vmul.f32 %v306, 0.125
        %v323 = vld [vmem:[%s274] sm:$0xff]
        %v324 = vld [vmem:[%s274 + $0x8] sm:$0xff]
        %v325 = vld [vmem:[%s274 + $0x10] sm:$0xff]
        %v326 = vld [vmem:[%s274 + $0x18] sm:$0xff]
        %v327 = vld [vmem:[%s274 + $0x20] sm:$0xff]
        %v328 = vld [vmem:[%s274 + $0x28] sm:$0xff]
        %v329 = vld [vmem:[%s274 + $0x30] sm:$0xff]
        %v330 = vld [vmem:[%s274 + $0x38] sm:$0xff]
        %v331 = vld [vmem:[%s274 + $0x40] sm:$0xff]
        %v332 = vld [vmem:[%s274 + $0x48] sm:$0xff]
        %v333 = vld [vmem:[%s274 + $0x50] sm:$0xff]
        %v334 = vld [vmem:[%s274 + $0x58] sm:$0xff]
        %v335 = vld [vmem:[%s274 + $0x60] sm:$0xff]
        %v336 = vld [vmem:[%s274 + $0x68] sm:$0xff]
        %v337 = vld [vmem:[%s274 + $0x70] sm:$0xff]
        %v338 = vld [vmem:[%s274 + $0x78] sm:$0xff]
        %v339 = vld [vmem:[%s274 + $0x80] sm:$0xff]
        %v340 = vld [vmem:[%s274 + $0x88] sm:$0xff]
        %v341 = vld [vmem:[%s274 + $0x90] sm:$0xff]
        %v342 = vld [vmem:[%s274 + $0x98] sm:$0xff]
        %v343 = vld [vmem:[%s274 + $0xa0] sm:$0xff]
        %v344 = vld [vmem:[%s274 + $0xa8] sm:$0xff]
        %v345 = vld [vmem:[%s274 + $0xb0] sm:$0xff]
        %v346 = vld [vmem:[%s274 + $0xb8] sm:$0xff]
        %v347 = vld [vmem:[%s274 + $0xc0] sm:$0xff]
        %v348 = vld [vmem:[%s274 + $0xc8] sm:$0xff]
        %v349 = vld [vmem:[%s274 + $0xd0] sm:$0xff]
        %v350 = vld [vmem:[%s274 + $0xd8] sm:$0xff]
        %v351 = vld [vmem:[%s274 + $0xe0] sm:$0xff]
        %v352 = vld [vmem:[%s274 + $0xe8] sm:$0xff]
        %v353 = vld [vmem:[%s274 + $0xf0] sm:$0xff]
        %v354 = vld [vmem:[%s274 + $0xf8] sm:$0xff]
        %vm355 = vcmask 523264
        %v357 = vsel %vm355, %v307, 0
        %v360 = vsel %vm355, %v308, 0
        %v363 = vsel %vm355, %v309, 0
        %v366 = vsel %vm355, %v310, 0
        %v369 = vsel %vm355, %v311, 0
        %v372 = vsel %vm355, %v312, 0
        %v375 = vsel %vm355, %v313, 0
        %v378 = vsel %vm355, %v314, 0
        %v381 = vsel %vm355, %v315, 0
        %v384 = vsel %vm355, %v316, 0
        %v387 = vsel %vm355, %v317, 0
        %v390 = vsel %vm355, %v318, 0
        %v393 = vsel %vm355, %v319, 0
        %v396 = vsel %vm355, %v320, 0
        %v399 = vsel %vm355, %v321, 0
        %v402 = vsel %vm355, %v322, 0
        %v405 = vsel %vm355, %v323, 0
        %v408 = vsel %vm355, %v324, 0
        %v411 = vsel %vm355, %v325, 0
        %v414 = vsel %vm355, %v326, 0
        %v417 = vsel %vm355, %v327, 0
        %v420 = vsel %vm355, %v328, 0
        %v423 = vsel %vm355, %v329, 0
        %v426 = vsel %vm355, %v330, 0
        %v429 = vsel %vm355, %v331, 0
        %v432 = vsel %vm355, %v332, 0
        %v435 = vsel %vm355, %v333, 0
        %v438 = vsel %vm355, %v334, 0
        %v441 = vsel %vm355, %v335, 0
        %v444 = vsel %vm355, %v336, 0
        %v447 = vsel %vm355, %v337, 0
        %v450 = vsel %vm355, %v338, 0
        %v453 = vsel %vm355, %v339, 0
        %v456 = vsel %vm355, %v340, 0
        %v459 = vsel %vm355, %v341, 0
        %v462 = vsel %vm355, %v342, 0
        %v465 = vsel %vm355, %v343, 0
        %v468 = vsel %vm355, %v344, 0
        %v471 = vsel %vm355, %v345, 0
        %v474 = vsel %vm355, %v346, 0
        %v477 = vsel %vm355, %v347, 0
        %v480 = vsel %vm355, %v348, 0
        %v483 = vsel %vm355, %v349, 0
        %v486 = vsel %vm355, %v350, 0
        %v489 = vsel %vm355, %v351, 0
        %v492 = vsel %vm355, %v352, 0
        %v495 = vsel %vm355, %v353, 0
        %v498 = vsel %vm355, %v354, 0
        %500 = vmatpush.xpose.msra.mxu0 %v450
        %501 = vmatpush.xpose.msra.mxu0 %v447
        %502 = vmatpush.xpose.msra.mxu0 %v444
        %503 = vmatpush.xpose.msra.mxu0 %v441
        %504 = vmatpush.xpose.msra.mxu0 %v438
        %505 = vmatpush.xpose.msra.mxu0 %v435
        %506 = vmatpush.xpose.msra.mxu0 %v432
        %507 = vmatpush.xpose.msra.mxu0 %v429
        %508 = vmatpush.xpose.msra.mxu0 %v426
        %509 = vmatpush.xpose.msra.mxu0 %v423
        %510 = vmatpush.xpose.msra.mxu0 %v420
        %511 = vmatpush.xpose.msra.mxu0 %v417
        %512 = vmatpush.xpose.msra.mxu0 %v414
        %513 = vmatpush.xpose.msra.mxu0 %v411
        %514 = vmatpush.xpose.msra.mxu0 %v408
        %515 = vmatpush.xpose.msra.mxu0 %v405
        %516 = vmatmul.f32.gmra.mxu0 %v357
        %v517 = vpop.f32.mrf.mxu0
        %v518 = vadd.f32 0.0, %v517
        %519 = vmatmul.f32.gmra.mxu0 %v360
        %v520 = vpop.f32.mrf.mxu0
        %v521 = vadd.f32 0.0, %v520
        %522 = vmatmul.f32.gmra.mxu0 %v363
        %v523 = vpop.f32.mrf.mxu0
        %v524 = vadd.f32 0.0, %v523
        %525 = vmatmul.f32.gmra.mxu0 %v366
        %v526 = vpop.f32.mrf.mxu0
        %v527 = vadd.f32 0.0, %v526
        %528 = vmatmul.f32.gmra.mxu0 %v369
        %v529 = vpop.f32.mrf.mxu0
        %v530 = vadd.f32 0.0, %v529
        %531 = vmatmul.f32.gmra.mxu0 %v372
        %v532 = vpop.f32.mrf.mxu0
        %v533 = vadd.f32 0.0, %v532
        %534 = vmatmul.f32.gmra.mxu0 %v375
        %v535 = vpop.f32.mrf.mxu0
        %v536 = vadd.f32 0.0, %v535
        %537 = vmatmul.f32.gmra.mxu0 %v378
        %v538 = vpop.f32.mrf.mxu0
        %v539 = vadd.f32 0.0, %v538
        %540 = vmatmul.f32.gmra.mxu0 %v381
        %v541 = vpop.f32.mrf.mxu0
        %v542 = vadd.f32 0.0, %v541
        %543 = vmatmul.f32.gmra.mxu0 %v384
        %v544 = vpop.f32.mrf.mxu0
        %v545 = vadd.f32 0.0, %v544
        %546 = vmatmul.f32.gmra.mxu0 %v387
        %v547 = vpop.f32.mrf.mxu0
        %v548 = vadd.f32 0.0, %v547
        %549 = vmatmul.f32.gmra.mxu0 %v390
        %v550 = vpop.f32.mrf.mxu0
        %v551 = vadd.f32 0.0, %v550
        %552 = vmatmul.f32.gmra.mxu0 %v393
        %v553 = vpop.f32.mrf.mxu0
        %v554 = vadd.f32 0.0, %v553
        %555 = vmatmul.f32.gmra.mxu0 %v396
        %v556 = vpop.f32.mrf.mxu0
        %v557 = vadd.f32 0.0, %v556
        %558 = vmatmul.f32.gmra.mxu0 %v399
        %v559 = vpop.f32.mrf.mxu0
        %v560 = vadd.f32 0.0, %v559
        %561 = vmatmul.f32.gmra.mxu0 %v402
        %v562 = vpop.f32.mrf.mxu0
        %v563 = vadd.f32 0.0, %v562
        %564 = vdwg.mxu0
        %565 = vmatpush.xpose.msra.mxu0 %v498
        %566 = vmatpush.xpose.msra.mxu0 %v495
        %567 = vmatpush.xpose.msra.mxu0 %v492
        %568 = vmatpush.xpose.msra.mxu0 %v489
        %569 = vmatpush.xpose.msra.mxu0 %v486
        %570 = vmatpush.xpose.msra.mxu0 %v483
        %571 = vmatpush.xpose.msra.mxu0 %v480
        %572 = vmatpush.xpose.msra.mxu0 %v477
        %573 = vmatpush.xpose.msra.mxu0 %v474
        %574 = vmatpush.xpose.msra.mxu0 %v471
        %575 = vmatpush.xpose.msra.mxu0 %v468
        %576 = vmatpush.xpose.msra.mxu0 %v465
        %577 = vmatpush.xpose.msra.mxu0 %v462
        %578 = vmatpush.xpose.msra.mxu0 %v459
        %579 = vmatpush.xpose.msra.mxu0 %v456
        %580 = vmatpush.xpose.msra.mxu0 %v453
        %581 = vmatmul.f32.gmra.mxu0 %v357
        %v582 = vpop.f32.mrf.mxu0
        %v583 = vadd.f32 0.0, %v582
        %584 = vmatmul.f32.gmra.mxu0 %v360
        %v585 = vpop.f32.mrf.mxu0
        %v586 = vadd.f32 0.0, %v585
        %587 = vmatmul.f32.gmra.mxu0 %v363
        %v588 = vpop.f32.mrf.mxu0
        %v589 = vadd.f32 0.0, %v588
        %590 = vmatmul.f32.gmra.mxu0 %v366
        %v591 = vpop.f32.mrf.mxu0
        %v592 = vadd.f32 0.0, %v591
        %593 = vmatmul.f32.gmra.mxu0 %v369
        %v594 = vpop.f32.mrf.mxu0
        %v595 = vadd.f32 0.0, %v594
        %596 = vmatmul.f32.gmra.mxu0 %v372
        %v597 = vpop.f32.mrf.mxu0
        %v598 = vadd.f32 0.0, %v597
        %599 = vmatmul.f32.gmra.mxu0 %v375
        %v600 = vpop.f32.mrf.mxu0
        %v601 = vadd.f32 0.0, %v600
        %602 = vmatmul.f32.gmra.mxu0 %v378
        %v603 = vpop.f32.mrf.mxu0
        %v604 = vadd.f32 0.0, %v603
        %605 = vmatmul.f32.gmra.mxu0 %v381
        %v606 = vpop.f32.mrf.mxu0
        %v607 = vadd.f32 0.0, %v606
        %608 = vmatmul.f32.gmra.mxu0 %v384
        %v609 = vpop.f32.mrf.mxu0
        %v610 = vadd.f32 0.0, %v609
        %611 = vmatmul.f32.gmra.mxu0 %v387
        %v612 = vpop.f32.mrf.mxu0
        %v613 = vadd.f32 0.0, %v612
        %614 = vmatmul.f32.gmra.mxu0 %v390
        %v615 = vpop.f32.mrf.mxu0
        %v616 = vadd.f32 0.0, %v615
        %617 = vmatmul.f32.gmra.mxu0 %v393
        %v618 = vpop.f32.mrf.mxu0
        %v619 = vadd.f32 0.0, %v618
        %620 = vmatmul.f32.gmra.mxu0 %v396
        %v621 = vpop.f32.mrf.mxu0
        %v622 = vadd.f32 0.0, %v621
        %623 = vmatmul.f32.gmra.mxu0 %v399
        %v624 = vpop.f32.mrf.mxu0
        %v625 = vadd.f32 0.0, %v624
        %626 = vmatmul.f32.gmra.mxu0 %v402
        %v627 = vpop.f32.mrf.mxu0
        %v628 = vadd.f32 0.0, %v627
        %629 = vdwg.mxu0
        %v630 = vmax.f32 %v518, %v583
        %631 = vmax.xlane.f32.xlu0 %v630
        %v632 = vpop.xlane.xlu0 %631
        %v633 = vmax.f32 %v521, %v586
        %634 = vmax.xlane.f32.xlu0 %v633
        %v635 = vpop.xlane.xlu0 %634
        %v636 = vmax.f32 %v524, %v589
        %637 = vmax.xlane.f32.xlu0 %v636
        %v638 = vpop.xlane.xlu0 %637
        %v639 = vmax.f32 %v527, %v592
        %640 = vmax.xlane.f32.xlu0 %v639
        %v641 = vpop.xlane.xlu0 %640
        %v642 = vmax.f32 %v530, %v595
        %643 = vmax.xlane.f32.xlu0 %v642
        %v644 = vpop.xlane.xlu0 %643
        %v645 = vmax.f32 %v533, %v598
        %646 = vmax.xlane.f32.xlu0 %v645
        %v647 = vpop.xlane.xlu0 %646
        %v648 = vmax.f32 %v536, %v601
        %649 = vmax.xlane.f32.xlu0 %v648
        %v650 = vpop.xlane.xlu0 %649
        %v651 = vmax.f32 %v539, %v604
        %652 = vmax.xlane.f32.xlu0 %v651
        %v653 = vpop.xlane.xlu0 %652
        %v654 = vmax.f32 %v542, %v607
        %655 = vmax.xlane.f32.xlu0 %v654
        %v656 = vpop.xlane.xlu0 %655
        %v657 = vmax.f32 %v545, %v610
        %658 = vmax.xlane.f32.xlu0 %v657
        %v659 = vpop.xlane.xlu0 %658
        %v660 = vmax.f32 %v548, %v613
        %661 = vmax.xlane.f32.xlu0 %v660
        %v662 = vpop.xlane.xlu0 %661
        %v663 = vmax.f32 %v551, %v616
        %664 = vmax.xlane.f32.xlu0 %v663
        %v665 = vpop.xlane.xlu0 %664
        %v666 = vmax.f32 %v554, %v619
        %667 = vmax.xlane.f32.xlu0 %v666
        %v668 = vpop.xlane.xlu0 %667
        %v669 = vmax.f32 %v557, %v622
        %670 = vmax.xlane.f32.xlu0 %v669
        %v671 = vpop.xlane.xlu0 %670
        %v672 = vmax.f32 %v560, %v625
        %673 = vmax.xlane.f32.xlu0 %v672
        %v674 = vpop.xlane.xlu0 %673
        %v675 = vmax.f32 %v563, %v628
        %676 = vmax.xlane.f32.xlu0 %v675
        %v677 = vpop.xlane.xlu0 %676
        %v678 = vsub.f32 %v518, %v632
        %v679 = vsub.f32 %v583, %v632
        %v680 = vsub.f32 %v521, %v635
        %v681 = vsub.f32 %v586, %v635
        %v682 = vsub.f32 %v524, %v638
        %v683 = vsub.f32 %v589, %v638
        %v684 = vsub.f32 %v527, %v641
        %v685 = vsub.f32 %v592, %v641
        %v686 = vsub.f32 %v530, %v644
        %v687 = vsub.f32 %v595, %v644
        %v688 = vsub.f32 %v533, %v647
        %v689 = vsub.f32 %v598, %v647
        %v690 = vsub.f32 %v536, %v650
        %v691 = vsub.f32 %v601, %v650
        %v692 = vsub.f32 %v539, %v653
        %v693 = vsub.f32 %v604, %v653
        %v694 = vsub.f32 %v542, %v656
        %v695 = vsub.f32 %v607, %v656
        %v696 = vsub.f32 %v545, %v659
        %v697 = vsub.f32 %v610, %v659
        %v698 = vsub.f32 %v548, %v662
        %v699 = vsub.f32 %v613, %v662
        %v700 = vsub.f32 %v551, %v665
        %v701 = vsub.f32 %v616, %v665
        %v702 = vsub.f32 %v554, %v668
        %v703 = vsub.f32 %v619, %v668
        %v704 = vsub.f32 %v557, %v671
        %v705 = vsub.f32 %v622, %v671
        %v706 = vsub.f32 %v560, %v674
        %v707 = vsub.f32 %v625, %v674
        %v708 = vsub.f32 %v563, %v677
        %v709 = vsub.f32 %v628, %v677
        %v710 = vmul.f32 %v678, 1.442695
        %v711 = vpow.pop %v710
        %v712 = vmul.f32 %v679, 1.442695
        %v713 = vpow.pop %v712
        %v714 = vmul.f32 %v680, 1.442695
        %v715 = vpow.pop %v714
        %v716 = vmul.f32 %v681, 1.442695
        %v717 = vpow.pop %v716
        %v718 = vmul.f32 %v682, 1.442695
        %v719 = vpow.pop %v718
        %v720 = vmul.f32 %v683, 1.442695
        %v721 = vpow.pop %v720
        %v722 = vmul.f32 %v684, 1.442695
        %v723 = vpow.pop %v722
        %v724 = vmul.f32 %v685, 1.442695
        %v725 = vpow.pop %v724
        %v726 = vmul.f32 %v686, 1.442695
        %v727 = vpow.pop %v726
        %v728 = vmul.f32 %v687, 1.442695
        %v729 = vpow.pop %v728
        %v730 = vmul.f32 %v688, 1.442695
        %v731 = vpow.pop %v730
        %v732 = vmul.f32 %v689, 1.442695
        %v733 = vpow.pop %v732
        %v734 = vmul.f32 %v690, 1.442695
        %v735 = vpow.pop %v734
        %v736 = vmul.f32 %v691, 1.442695
        %v737 = vpow.pop %v736
        %v738 = vmul.f32 %v692, 1.442695
        %v739 = vpow.pop %v738
        %v740 = vmul.f32 %v693, 1.442695
        %v741 = vpow.pop %v740
        %v742 = vmul.f32 %v694, 1.442695
        %v743 = vpow.pop %v742
        %v744 = vmul.f32 %v695, 1.442695
        %v745 = vpow.pop %v744
        %v746 = vmul.f32 %v696, 1.442695
        %v747 = vpow.pop %v746
        %v748 = vmul.f32 %v697, 1.442695
        %v749 = vpow.pop %v748
        %v750 = vmul.f32 %v698, 1.442695
        %v751 = vpow.pop %v750
        %v752 = vmul.f32 %v699, 1.442695
        %v753 = vpow.pop %v752
        %v754 = vmul.f32 %v700, 1.442695
        %v755 = vpow.pop %v754
        %v756 = vmul.f32 %v701, 1.442695
        %v757 = vpow.pop %v756
        %v758 = vmul.f32 %v702, 1.442695
        %v759 = vpow.pop %v758
        %v760 = vmul.f32 %v703, 1.442695
        %v761 = vpow.pop %v760
        %v762 = vmul.f32 %v704, 1.442695
        %v763 = vpow.pop %v762
        %v764 = vmul.f32 %v705, 1.442695
        %v765 = vpow.pop %v764
        %v766 = vmul.f32 %v706, 1.442695
        %v767 = vpow.pop %v766
        %v768 = vmul.f32 %v707, 1.442695
        %v769 = vpow.pop %v768
        %v770 = vmul.f32 %v708, 1.442695
        %v771 = vpow.pop %v770
        %v772 = vmul.f32 %v709, 1.442695
        %v773 = vpow.pop %v772
        %v774 = vadd.f32 %v711, %v713
        %775 = vadd.xlane.f32.xlu0 %v774
        %v776 = vpop.xlane.xlu0 %775
        %v777 = vadd.f32 %v715, %v717
        %778 = vadd.xlane.f32.xlu0 %v777
        %v779 = vpop.xlane.xlu0 %778
        %v780 = vadd.f32 %v719, %v721
        %781 = vadd.xlane.f32.xlu0 %v780
        %v782 = vpop.xlane.xlu0 %781
        %v783 = vadd.f32 %v723, %v725
        %784 = vadd.xlane.f32.xlu0 %v783
        %v785 = vpop.xlane.xlu0 %784
        %v786 = vadd.f32 %v727, %v729
        %787 = vadd.xlane.f32.xlu0 %v786
        %v788 = vpop.xlane.xlu0 %787
        %v789 = vadd.f32 %v731, %v733
        %790 = vadd.xlane.f32.xlu0 %v789
        %v791 = vpop.xlane.xlu0 %790
        %v792 = vadd.f32 %v735, %v737
        %793 = vadd.xlane.f32.xlu0 %v792
        %v794 = vpop.xlane.xlu0 %793
        %v795 = vadd.f32 %v739, %v741
        %796 = vadd.xlane.f32.xlu0 %v795
        %v797 = vpop.xlane.xlu0 %796
        %v798 = vadd.f32 %v743, %v745
        %799 = vadd.xlane.f32.xlu0 %v798
        %v800 = vpop.xlane.xlu0 %799
        %v801 = vadd.f32 %v747, %v749
        %802 = vadd.xlane.f32.xlu0 %v801
        %v803 = vpop.xlane.xlu0 %802
        %v804 = vadd.f32 %v751, %v753
        %805 = vadd.xlane.f32.xlu0 %v804
        %v806 = vpop.xlane.xlu0 %805
        %v807 = vadd.f32 %v755, %v757
        %808 = vadd.xlane.f32.xlu0 %v807
        %v809 = vpop.xlane.xlu0 %808
        %v810 = vadd.f32 %v759, %v761
        %811 = vadd.xlane.f32.xlu0 %v810
        %v812 = vpop.xlane.xlu0 %811
        %v813 = vadd.f32 %v763, %v765
        %814 = vadd.xlane.f32.xlu0 %v813
        %v815 = vpop.xlane.xlu0 %814
        %v816 = vadd.f32 %v767, %v769
        %817 = vadd.xlane.f32.xlu0 %v816
        %v818 = vpop.xlane.xlu0 %817
        %v819 = vadd.f32 %v771, %v773
        %820 = vadd.xlane.f32.xlu0 %v819
        %v821 = vpop.xlane.xlu0 %820
        %v822 = vrcp.pop %v776
        %v823 = vrcp.pop %v779
        %v824 = vrcp.pop %v782
        %v825 = vrcp.pop %v785
        %v826 = vrcp.pop %v788
        %v827 = vrcp.pop %v791
        %v828 = vrcp.pop %v794
        %v829 = vrcp.pop %v797
        %v830 = vrcp.pop %v800
        %v831 = vrcp.pop %v803
        %v832 = vrcp.pop %v806
        %v833 = vrcp.pop %v809
        %v834 = vrcp.pop %v812
        %v835 = vrcp.pop %v815
        %v836 = vrcp.pop %v818
        %v837 = vrcp.pop %v821
        %v838 = vmul.f32 %v711, %v822
        %v839 = vmul.f32 %v713, %v822
        %v840 = vmul.f32 %v715, %v823
        %v841 = vmul.f32 %v717, %v823
        %v842 = vmul.f32 %v719, %v824
        %v843 = vmul.f32 %v721, %v824
        %v844 = vmul.f32 %v723, %v825
        %v845 = vmul.f32 %v725, %v825
        %v846 = vmul.f32 %v727, %v826
        %v847 = vmul.f32 %v729, %v826
        %v848 = vmul.f32 %v731, %v827
        %v849 = vmul.f32 %v733, %v827
        %v850 = vmul.f32 %v735, %v828
        %v851 = vmul.f32 %v737, %v828
        %v852 = vmul.f32 %v739, %v829
        %v853 = vmul.f32 %v741, %v829
        %v854 = vmul.f32 %v743, %v830
        %v855 = vmul.f32 %v745, %v830
        %v856 = vmul.f32 %v747, %v831
        %v857 = vmul.f32 %v749, %v831
        %v858 = vmul.f32 %v751, %v832
        %v859 = vmul.f32 %v753, %v832
        %v860 = vmul.f32 %v755, %v833
        %v861 = vmul.f32 %v757, %v833
        %v862 = vmul.f32 %v759, %v834
        %v863 = vmul.f32 %v761, %v834
        %v864 = vmul.f32 %v763, %v835
        %v865 = vmul.f32 %v765, %v835
        %v866 = vmul.f32 %v767, %v836
        %v867 = vmul.f32 %v769, %v836
        %v868 = vmul.f32 %v771, %v837
        %v869 = vmul.f32 %v773, %v837
        %v870 = vld [vmem:[%s279] sm:$0xff]
        %v871 = vld [vmem:[%s279 + $0x8] sm:$0xff]
        %v872 = vld [vmem:[%s279 + $0x10] sm:$0xff]
        %v873 = vld [vmem:[%s279 + $0x18] sm:$0xff]
        %v874 = vld [vmem:[%s279 + $0x20] sm:$0xff]
        %v875 = vld [vmem:[%s279 + $0x28] sm:$0xff]
        %v876 = vld [vmem:[%s279 + $0x30] sm:$0xff]
        %v877 = vld [vmem:[%s279 + $0x38] sm:$0xff]
        %v878 = vld [vmem:[%s279 + $0x40] sm:$0xff]
        %v879 = vld [vmem:[%s279 + $0x48] sm:$0xff]
        %v880 = vld [vmem:[%s279 + $0x50] sm:$0xff]
        %v881 = vld [vmem:[%s279 + $0x58] sm:$0xff]
        %v882 = vld [vmem:[%s279 + $0x60] sm:$0xff]
        %v883 = vld [vmem:[%s279 + $0x68] sm:$0xff]
        %v884 = vld [vmem:[%s279 + $0x70] sm:$0xff]
        %v885 = vld [vmem:[%s279 + $0x78] sm:$0xff]
        %v886 = vld [vmem:[%s279 + $0x80] sm:$0xff]
        %v887 = vld [vmem:[%s279 + $0x88] sm:$0xff]
        %v888 = vld [vmem:[%s279 + $0x90] sm:$0xff]
        %v889 = vld [vmem:[%s279 + $0x98] sm:$0xff]
        %v890 = vld [vmem:[%s279 + $0xa0] sm:$0xff]
        %v891 = vld [vmem:[%s279 + $0xa8] sm:$0xff]
        %v892 = vld [vmem:[%s279 + $0xb0] sm:$0xff]
        %v893 = vld [vmem:[%s279 + $0xb8] sm:$0xff]
        %v894 = vld [vmem:[%s279 + $0xc0] sm:$0xff]
        %v895 = vld [vmem:[%s279 + $0xc8] sm:$0xff]
        %v896 = vld [vmem:[%s279 + $0xd0] sm:$0xff]
        %v897 = vld [vmem:[%s279 + $0xd8] sm:$0xff]
        %v898 = vld [vmem:[%s279 + $0xe0] sm:$0xff]
        %v899 = vld [vmem:[%s279 + $0xe8] sm:$0xff]
        %v900 = vld [vmem:[%s279 + $0xf0] sm:$0xff]
        %v901 = vld [vmem:[%s279 + $0xf8] sm:$0xff]
        %902 = vst [vmem:[%s259] sm:$0xff] %v838
        %903 = vst [vmem:[%s259 + $0x8] sm:$0xff] %v839
        %904 = vst [vmem:[%s259 + $0x10] sm:$0xff] %v840
        %905 = vst [vmem:[%s259 + $0x18] sm:$0xff] %v841
        %906 = vst [vmem:[%s259 + $0x20] sm:$0xff] %v842
        %907 = vst [vmem:[%s259 + $0x28] sm:$0xff] %v843
        %908 = vst [vmem:[%s259 + $0x30] sm:$0xff] %v844
        %909 = vst [vmem:[%s259 + $0x38] sm:$0xff] %v845
        %910 = vst [vmem:[%s259 + $0x40] sm:$0xff] %v846
        %911 = vst [vmem:[%s259 + $0x48] sm:$0xff] %v847
        %912 = vst [vmem:[%s259 + $0x50] sm:$0xff] %v848
        %913 = vst [vmem:[%s259 + $0x58] sm:$0xff] %v849
        %914 = vst [vmem:[%s259 + $0x60] sm:$0xff] %v850
        %915 = vst [vmem:[%s259 + $0x68] sm:$0xff] %v851
        %916 = vst [vmem:[%s259 + $0x70] sm:$0xff] %v852
        %917 = vst [vmem:[%s259 + $0x78] sm:$0xff] %v853
        %918 = vst [vmem:[%s259 + $0x80] sm:$0xff] %v854
        %919 = vst [vmem:[%s259 + $0x88] sm:$0xff] %v855
        %920 = vst [vmem:[%s259 + $0x90] sm:$0xff] %v856
        %921 = vst [vmem:[%s259 + $0x98] sm:$0xff] %v857
        %922 = vst [vmem:[%s259 + $0xa0] sm:$0xff] %v858
        %923 = vst [vmem:[%s259 + $0xa8] sm:$0xff] %v859
        %924 = vst [vmem:[%s259 + $0xb0] sm:$0xff] %v860
        %925 = vst [vmem:[%s259 + $0xb8] sm:$0xff] %v861
        %926 = vst [vmem:[%s259 + $0xc0] sm:$0xff] %v862
        %927 = vst [vmem:[%s259 + $0xc8] sm:$0xff] %v863
        %928 = vst [vmem:[%s259 + $0xd0] sm:$0xff] %v864
        %929 = vst [vmem:[%s259 + $0xd8] sm:$0xff] %v865
        %930 = vst [vmem:[%s259 + $0xe0] sm:$0xff] %v866
        %931 = vst [vmem:[%s259 + $0xe8] sm:$0xff] %v867
        %932 = vst [vmem:[%s259 + $0xf0] sm:$0xff] %v868
        %933 = vst [vmem:[%s259 + $0xf8] sm:$0xff] %v869
        %934 = vmatpush.msra.mxu0 %v885
        %935 = vmatpush.msra.mxu0 %v884
        %936 = vmatpush.msra.mxu0 %v883
        %937 = vmatpush.msra.mxu0 %v882
        %938 = vmatpush.msra.mxu0 %v881
        %939 = vmatpush.msra.mxu0 %v880
        %940 = vmatpush.msra.mxu0 %v879
        %941 = vmatpush.msra.mxu0 %v878
        %942 = vmatpush.msra.mxu0 %v877
        %943 = vmatpush.msra.mxu0 %v876
        %944 = vmatpush.msra.mxu0 %v875
        %945 = vmatpush.msra.mxu0 %v874
        %946 = vmatpush.msra.mxu0 %v873
        %947 = vmatpush.msra.mxu0 %v872
        %948 = vmatpush.msra.mxu0 %v871
        %949 = vmatpush.msra.mxu0 %v870
        %950 = vmatmul.f32.gmra.mxu0 %v838
        %v951 = vpop.f32.mrf.mxu0
        %v952 = vadd.f32 0.0, %v951
        %953 = vmatmul.f32.gmra.mxu0 %v840
        %v954 = vpop.f32.mrf.mxu0
        %v955 = vadd.f32 0.0, %v954
        %956 = vmatmul.f32.gmra.mxu0 %v842
        %v957 = vpop.f32.mrf.mxu0
        %v958 = vadd.f32 0.0, %v957
        %959 = vmatmul.f32.gmra.mxu0 %v844
        %v960 = vpop.f32.mrf.mxu0
        %v961 = vadd.f32 0.0, %v960
        %962 = vmatmul.f32.gmra.mxu0 %v846
        %v963 = vpop.f32.mrf.mxu0
        %v964 = vadd.f32 0.0, %v963
        %965 = vmatmul.f32.gmra.mxu0 %v848
        %v966 = vpop.f32.mrf.mxu0
        %v967 = vadd.f32 0.0, %v966
        %968 = vmatmul.f32.gmra.mxu0 %v850
        %v969 = vpop.f32.mrf.mxu0
        %v970 = vadd.f32 0.0, %v969
        %971 = vmatmul.f32.gmra.mxu0 %v852
        %v972 = vpop.f32.mrf.mxu0
        %v973 = vadd.f32 0.0, %v972
        %974 = vmatmul.f32.gmra.mxu0 %v854
        %v975 = vpop.f32.mrf.mxu0
        %v976 = vadd.f32 0.0, %v975
        %977 = vmatmul.f32.gmra.mxu0 %v856
        %v978 = vpop.f32.mrf.mxu0
        %v979 = vadd.f32 0.0, %v978
        %980 = vmatmul.f32.gmra.mxu0 %v858
        %v981 = vpop.f32.mrf.mxu0
        %v982 = vadd.f32 0.0, %v981
        %983 = vmatmul.f32.gmra.mxu0 %v860
        %v984 = vpop.f32.mrf.mxu0
        %v985 = vadd.f32 0.0, %v984
        %986 = vmatmul.f32.gmra.mxu0 %v862
        %v987 = vpop.f32.mrf.mxu0
        %v988 = vadd.f32 0.0, %v987
        %989 = vmatmul.f32.gmra.mxu0 %v864
        %v990 = vpop.f32.mrf.mxu0
        %v991 = vadd.f32 0.0, %v990
        %992 = vmatmul.f32.gmra.mxu0 %v866
        %v993 = vpop.f32.mrf.mxu0
        %v994 = vadd.f32 0.0, %v993
        %995 = vmatmul.f32.gmra.mxu0 %v868
        %v996 = vpop.f32.mrf.mxu0
        %v997 = vadd.f32 0.0, %v996
        %998 = vdwg.mxu0
        %999 = vmatpush.msra.mxu0 %v901
        %1000 = vmatpush.msra.mxu0 %v900
        %1001 = vmatpush.msra.mxu0 %v899
        %1002 = vmatpush.msra.mxu0 %v898
        %1003 = vmatpush.msra.mxu0 %v897
        %1004 = vmatpush.msra.mxu0 %v896
        %1005 = vmatpush.msra.mxu0 %v895
        %1006 = vmatpush.msra.mxu0 %v894
        %1007 = vmatpush.msra.mxu0 %v893
        %1008 = vmatpush.msra.mxu0 %v892
        %1009 = vmatpush.msra.mxu0 %v891
        %1010 = vmatpush.msra.mxu0 %v890
        %1011 = vmatpush.msra.mxu0 %v889
        %1012 = vmatpush.msra.mxu0 %v888
        %1013 = vmatpush.msra.mxu0 %v887
        %1014 = vmatpush.msra.mxu0 %v886
        %1015 = vmatmul.f32.gmra.mxu0 %v839
        %v1016 = vpop.f32.mrf.mxu0
        %v1017 = vadd.f32 %v952, %v1016
        %1018 = vmatmul.f32.gmra.mxu0 %v841
        %v1019 = vpop.f32.mrf.mxu0
        %v1020 = vadd.f32 %v955, %v1019
        %1021 = vmatmul.f32.gmra.mxu0 %v843
        %v1022 = vpop.f32.mrf.mxu0
        %v1023 = vadd.f32 %v958, %v1022
        %1024 = vmatmul.f32.gmra.mxu0 %v845
        %v1025 = vpop.f32.mrf.mxu0
        %v1026 = vadd.f32 %v961, %v1025
        %1027 = vmatmul.f32.gmra.mxu0 %v847
        %v1028 = vpop.f32.mrf.mxu0
        %v1029 = vadd.f32 %v964, %v1028
        %1030 = vmatmul.f32.gmra.mxu0 %v849
        %v1031 = vpop.f32.mrf.mxu0
        %v1032 = vadd.f32 %v967, %v1031
        %1033 = vmatmul.f32.gmra.mxu0 %v851
        %v1034 = vpop.f32.mrf.mxu0
        %v1035 = vadd.f32 %v970, %v1034
        %1036 = vmatmul.f32.gmra.mxu0 %v853
        %v1037 = vpop.f32.mrf.mxu0
        %v1038 = vadd.f32 %v973, %v1037
        %1039 = vmatmul.f32.gmra.mxu0 %v855
        %v1040 = vpop.f32.mrf.mxu0
        %v1041 = vadd.f32 %v976, %v1040
        %1042 = vmatmul.f32.gmra.mxu0 %v857
        %v1043 = vpop.f32.mrf.mxu0
        %v1044 = vadd.f32 %v979, %v1043
        %1045 = vmatmul.f32.gmra.mxu0 %v859
        %v1046 = vpop.f32.mrf.mxu0
        %v1047 = vadd.f32 %v982, %v1046
        %1048 = vmatmul.f32.gmra.mxu0 %v861
        %v1049 = vpop.f32.mrf.mxu0
        %v1050 = vadd.f32 %v985, %v1049
        %1051 = vmatmul.f32.gmra.mxu0 %v863
        %v1052 = vpop.f32.mrf.mxu0
        %v1053 = vadd.f32 %v988, %v1052
        %1054 = vmatmul.f32.gmra.mxu0 %v865
        %v1055 = vpop.f32.mrf.mxu0
        %v1056 = vadd.f32 %v991, %v1055
        %1057 = vmatmul.f32.gmra.mxu0 %v867
        %v1058 = vpop.f32.mrf.mxu0
        %v1059 = vadd.f32 %v994, %v1058
        %1060 = vmatmul.f32.gmra.mxu0 %v869
        %v1061 = vpop.f32.mrf.mxu0
        %v1062 = vadd.f32 %v997, %v1061
        %1063 = vdwg.mxu0
        %1064 = vst.msk [vmem:[%s288] sm:$0xff] %vm355, %v1017
        %1065 = vst.msk [vmem:[%s288 + $0x8] sm:$0xff] %vm355, %v1020
        %1066 = vst.msk [vmem:[%s288 + $0x10] sm:$0xff] %vm355, %v1023
        %1067 = vst.msk [vmem:[%s288 + $0x18] sm:$0xff] %vm355, %v1026
        %1068 = vst.msk [vmem:[%s288 + $0x20] sm:$0xff] %vm355, %v1029
        %1069 = vst.msk [vmem:[%s288 + $0x28] sm:$0xff] %vm355, %v1032
        %1070 = vst.msk [vmem:[%s288 + $0x30] sm:$0xff] %vm355, %v1035
        %1071 = vst.msk [vmem:[%s288 + $0x38] sm:$0xff] %vm355, %v1038
        %1072 = vst.msk [vmem:[%s288 + $0x40] sm:$0xff] %vm355, %v1041
        %1073 = vst.msk [vmem:[%s288 + $0x48] sm:$0xff] %vm355, %v1044
        %1074 = vst.msk [vmem:[%s288 + $0x50] sm:$0xff] %vm355, %v1047
        %1075 = vst.msk [vmem:[%s288 + $0x58] sm:$0xff] %vm355, %v1050
        %1076 = vst.msk [vmem:[%s288 + $0x60] sm:$0xff] %vm355, %v1053
        %1077 = vst.msk [vmem:[%s288 + $0x68] sm:$0xff] %vm355, %v1056
        %1078 = vst.msk [vmem:[%s288 + $0x70] sm:$0xff] %vm355, %v1059
        %1079 = vst.msk [vmem:[%s288 + $0x78] sm:$0xff] %vm355, %v1062
        %s1080 = smul.u32 16, %s24
        %p1081 = scmp.lt.s32.totalorder %s23, 7
        %s1082 = scalar_select %p1081, %s23, 7
        %p1083 = scmp.lt.s32.totalorder %s1080, 31
        %s1084 = scalar_select %p1083, %s1080, 31
        %s1085 = smul.addr %s1082, 32
        %s1086 = sadd.s32 %s1084, %s1085
        %s1087 = smul.addr %s1086, 8
        %s1088 = scalar_lea.vmem %s3, %s1087
        %s1089 = sand.u32 %s149, 1
        %s1090 = scalar_lea.sflag [#allocation3], %s1089
        %s1091 = sand.u32 %s149, 1
        %s1092 = smul.addr %s1091, 256
        %s1093 = scalar_lea.vmem [#allocation2], %s1092
        // Predicated region
        $region33: #{tpu_custom_call.1} parent=31 // pred_check
          %p1094 = pneg %p131
        $region34: #{tpu_custom_call.1} parent=31 // pred_check_branch
          %1096 = sbr.rel (%p1094) target = $region36
        $region35: #{tpu_custom_call.1} parent=31 // pred_region
          %s1097 = smul.u32 16, %s24
        $region36: #{tpu_custom_call.1} parent=31 // pred_fallthru
          _
        // Predicated region
        $region37: #{tpu_custom_call.1} parent=31 // pred_check
          %p1098 = pneg %p159
        $region38: #{tpu_custom_call.1} parent=31 // pred_check_branch
          %1100 = sbr.rel (%p1098) target = $region40
        $region39: #{tpu_custom_call.1} parent=31 // pred_region
          %s1101 = smul.u32 16, %s24
          %1103 = vsyncadd %s1090, 0
          %s1104 = smul.addr %s1101, 2
          %s1105 = smul.addr %s23, 64
          %s1106 = sadd.s32 %s1104, %s1105
          %s1107 = smul.addr %s1106, 8
          %s1108 = scalar_lea.hbm %s4, %s1107
          %s1109 = sshll.u32 %s1093, 4
          %s1110 = int_to_ptr.vmem [resolvable:$true] %s1109
          %s1111 = sshll.u32 %s1108, 4
          %s1112 = int_to_ptr.hbm [resolvable:$true] %s1111
          %1117 = dma.vmem_to_hbm [thread:$0]  %s1110, 4096, %s1112, %s1090, 256, 256, 16
        $region40: #{tpu_custom_call.1} parent=31 // pred_fallthru
          _
      $region32: #{tpu_custom_call.1} parent=5 // pred_fallthru
        _
      %p1118 = scmp.le.s32.totalorder 2, %s14
      // Predicated region
      $region41: #{tpu_custom_call.1} parent=5 // pred_check
        %p1119 = pneg %p1118
      $region42: #{tpu_custom_call.1} parent=5 // pred_check_branch
        %1121 = sbr.rel (%p1119) target = $region44
      $region43: #{tpu_custom_call.1} parent=5 // pred_region
        %s1122 = ssub.s32 %s14, 2
        // Predicated region
        $region45: #{tpu_custom_call.1} parent=43 // pred_check
          %p1123 = pneg %p137
        $region46: #{tpu_custom_call.1} parent=43 // pred_check_branch
          %1125 = sbr.rel (%p1123) target = $region48
        $region47: #{tpu_custom_call.1} parent=43 // pred_region
          %s1126 = smul.u32 16, %s26
          %p1127 = scmp.lt.s32.totalorder %s25, 7
          %s1128 = scalar_select %p1127, %s25, 7
          %p1129 = scmp.lt.s32.totalorder %s1126, 31
          %s1130 = scalar_select %p1129, %s1126, 31
          %s1131 = smul.addr %s1128, 32
          %s1132 = sadd.s32 %s1130, %s1131
          %s1133 = smul.addr %s1132, 8
          %s1134 = scalar_lea.vmem %s3, %s1133
        $region48: #{tpu_custom_call.1} parent=43 // pred_fallthru
          _
        // Predicated region
        $region49: #{tpu_custom_call.1} parent=43 // pred_check
          %p1135 = pneg %p165
        $region50: #{tpu_custom_call.1} parent=43 // pred_check_branch
          %1137 = sbr.rel (%p1135) target = $region52
        $region51: #{tpu_custom_call.1} parent=43 // pred_region
          %s1138 = sand.u32 %s150, 1
          %s1139 = scalar_lea.sflag [#allocation3], %s1138
          %s1140 = sand.u32 %s150, 1
          %s1141 = smul.addr %s1140, 256
          %s1142 = scalar_lea.vmem [#allocation2], %s1141
          %1144 = dma.done %s1139, 4096
        $region52: #{tpu_custom_call.1} parent=43 // pred_fallthru
          _
      $region44: #{tpu_custom_call.1} parent=5 // pred_fallthru
        _
    $region6: #{tpu_custom_call.1} parent=1 // loop_footer
      %s18 = sadd.s32 1, %s14
    $region7: #{tpu_custom_call.1} parent=1 // loop_footer_branch
      %13 = sbr.rel target = $region3
    $region8: #{tpu_custom_call.1} parent=1 // loop_exit
      _
    %1145 = vsyncpa [#allocation3], 1
    %s1146 = scalar_lea.sflag [#allocation3], 1
    %1147 = vsyncpa %s1146, 1

</llo_original>
